<compile_context>
chip_gen: v5e
topology: v5e:2x2
jax: 0.10.0
libtpu: 0.0.40
codegen_flags: <defaults>
</compile_context>

<pallas_src>
import functools

import jax
import jax.numpy as jnp
from jax.experimental import pallas as pl
from jax.experimental.pallas import tpu as pltpu


def _round_up(x, m):
    return (x + m - 1) // m * m


def _vae_kernel(
    s_ref,          # [TB, S]   states
    a_ref,          # [TB, A]   actions
    eps_ref,        # [TB, L]   standard-normal noise
    we1s_ref,       # [S, H0]   encoder L1 (state rows)
    we1a_ref,       # [A, H0]   encoder L1 (action rows)
    we2_ref,        # [H0, H1]
    we3_ref,        # [H1, 2L]  fused mu / log-std head
    wd1s_ref,       # [S, H1]   decoder L1 (state rows)
    wd1z_ref,       # [L, H1]   decoder L1 (latent rows)
    wd2_ref,        # [H1, H0]
    wd3_ref,        # [H0, A]
    bias_ref,       # [6, BW]   packed biases (f32): be1, be2, be3, bd1, bd2, bd3
    out_ref,        # [TB, PACKW] packed output: [a | mu | std | zero-pad]
    *, A, L, H0, H1, PACKW, mm_dtype,
):
    f32 = jnp.float32
    s = s_ref[...]
    a = a_ref[...]
    eps = eps_ref[...]
    bias = bias_ref[...]

    def mm(x, w_ref):
        # bf16 (or f32) operands on the MXU, f32 accumulation.
        return jnp.dot(x.astype(mm_dtype), w_ref[...], preferred_element_type=f32)

    be1 = bias[0:1, :H0]
    be2 = bias[1:2, :H1]
    be3 = bias[2:3, :2 * L]
    bd1 = bias[3:4, :H1]
    bd2 = bias[4:5, :H0]
    bd3 = bias[5:6, :A]

    # ---- encoder ----  (cat([s, a], 1) @ We1 == s @ We1_s + a @ We1_a)
    h = jnp.maximum(mm(s, we1s_ref) + mm(a, we1a_ref) + be1, 0.0)
    h = jnp.maximum(mm(h, we2_ref) + be2, 0.0)
    z2 = mm(h, we3_ref) + be3                      # fused [mu | log_std] head

    mu = z2[:, :L]
    lg_std = z2[:, L:]

    # ---- reparameterize (f32 elementwise) ----
    std = jnp.exp(jnp.clip(lg_std, -4.0, 15.0))
    z = mu + std * eps

    # ---- decoder ----  (cat([s, z], 1) @ Wd1 == s @ Wd1_s + z @ Wd1_z)
    d = jnp.maximum(mm(s, wd1s_ref) + mm(z, wd1z_ref) + bd1, 0.0)
    d = jnp.maximum(mm(d, wd2_ref) + bd2, 0.0)
    act = jnp.tanh(mm(d, wd3_ref) + bd3)

    # ---- single lane-dense packed store: [a | mu | std | 0-pad] ----
    pieces = [act, mu, std]
    pad_w = PACKW - (A + 2 * L)
    if pad_w > 0:
        pieces.append(jnp.zeros((act.shape[0], pad_w), f32))
    out_ref[...] = jnp.concatenate(pieces, axis=1)


def vae_forward(states, actions, eps, params, *,
                matmul_dtype=jnp.bfloat16, block_b=512):
    """states: [B, S], actions: [B, A], eps: [B, L] standard-normal noise."""
    B, S = states.shape
    A = actions.shape[1]
    L = eps.shape[1]
    (we1, be1, we2, be2, we3, be3, wd1, bd1, wd2, bd2, wd3, bd3) = params
    H0 = we1.shape[1]
    H1 = we2.shape[1]
    assert we3.shape[1] == 2 * L

    wdt = matmul_dtype
    # Split first-layer weights along K so the kernel never needs input concat.
    we1s, we1a = we1[:S, :], we1[S:, :]
    wd1s, wd1z = wd1[:S, :], wd1[S:, :]
    weights = tuple(w.astype(wdt)
                    for w in (we1s, we1a, we2, we3, wd1s, wd1z, wd2, wd3))

    # Pack all biases into a single [6, BW] f32 operand (one DMA, not six).
    BW = max(H0, H1, 2 * L, A)

    def _padb(b):
        b = jnp.asarray(b, jnp.float32).reshape(1, -1)
        return jnp.pad(b, ((0, 0), (0, BW - b.shape[1])))

    bias_packed = jnp.concatenate(
        [_padb(be1), _padb(be2), _padb(be3), _padb(bd1), _padb(bd2), _padb(bd3)],
        axis=0)

    # Batch tiling: pad B to a multiple of the tile; weights stay resident.
    block_b = max(8, _round_up(block_b, 8))
    TB = min(_round_up(B, 8), block_b)
    Bp = _round_up(B, TB)

    def _pad_batch(x):
        x = jnp.asarray(x, jnp.float32)
        return jnp.pad(x, ((0, Bp - B), (0, 0))) if Bp != B else x

    s_p = _pad_batch(states)
    a_p = _pad_batch(actions)
    e_p = _pad_batch(eps)

    PACKW = _round_up(A + 2 * L, 128)   # lane-dense packed output width
    grid = (Bp // TB,)

    def act_spec(feat):
        return pl.BlockSpec((TB, feat), lambda i: (i, 0))

    def resident_spec(arr):
        return pl.BlockSpec(arr.shape, lambda i: (0, 0))

    kernel = functools.partial(
        _vae_kernel, A=A, L=L, H0=H0, H1=H1, PACKW=PACKW, mm_dtype=wdt)

    # Advisory cost hint for the XLA scheduler.
    flops = 2 * Bp * (S * H0 + A * H0 + H0 * H1 + H1 * 2 * L
                      + S * H1 + L * H1 + H1 * H0 + H0 * A)
    transcendentals = Bp * (L + A)        # exp + tanh
    in_arrays = (s_p, a_p, e_p) + weights + (bias_packed,)
    bytes_accessed = int(sum(int(x.size) * x.dtype.itemsize for x in in_arrays)
                         + Bp * PACKW * 4)

    packed = pl.pallas_call(
        kernel,
        out_shape=jax.ShapeDtypeStruct((Bp, PACKW), jnp.float32),
        grid=grid,
        in_specs=[act_spec(S), act_spec(A), act_spec(L)]
                 + [resident_spec(w) for w in weights]
                 + [resident_spec(bias_packed)],
        out_specs=pl.BlockSpec((TB, PACKW), lambda i: (i, 0)),
        compiler_params=pltpu.CompilerParams(
            dimension_semantics=("parallel",)),
        cost_estimate=pl.CostEstimate(
            flops=int(flops),
            transcendentals=int(transcendentals),
            bytes_accessed=bytes_accessed),
    )(*in_arrays)

    out_a = packed[:B, :A]
    mu = packed[:B, A:A + L]
    std = packed[:B, A + L:A + 2 * L]
    return out_a, mu, std


def init_params(key, state_dim, action_dim, hidden, latent_dim):
    """Deterministic synthetic parameters (Linear weights stored as [in, out])."""
    dims_enc = [(state_dim + action_dim, hidden[0]),
                (hidden[0], hidden[1]),
                (hidden[1], 2 * latent_dim)]
    dims_dec = [(state_dim + latent_dim, hidden[1]),
                (hidden[1], hidden[0]),
                (hidden[0], action_dim)]
    params = []
    for (fan_in, fan_out) in dims_enc + dims_dec:
        key, kw, kb = jax.random.split(key, 3)
        bound = 1.0 / jnp.sqrt(fan_in)
        w = jax.random.uniform(kw, (fan_in, fan_out), jnp.float32, -bound, bound)
        b = jax.random.uniform(kb, (1, fan_out), jnp.float32, -bound, bound)
        params += [w, b]
    return tuple(params)


def reference_forward(states, actions, eps, params, mm_dtype=jnp.float32):
    """Pure-JAX reference mirroring the PyTorch forward (optionally with the
    same bf16-operand / f32-accumulate matmul convention as the kernel)."""
    (we1, be1, we2, be2, we3, be3, wd1, bd1, wd2, bd2, wd3, bd3) = params
    L = we3.shape[1] // 2

    def mm(x, w):
        return jnp.dot(x.astype(mm_dtype), w.astype(mm_dtype),
                       preferred_element_type=jnp.float32)

    x = jnp.concatenate([states, actions], axis=1)
    h = jax.nn.relu(mm(x, we1) + be1)
    h = jax.nn.relu(mm(h, we2) + be2)
    z2 = mm(h, we3) + be3
    mu, lg_std = z2[:, :L], z2[:, L:]
    std = jnp.exp(jnp.clip(lg_std, -4.0, 15.0))
    z = mu + std * eps
    d = jnp.concatenate([states, z], axis=1)
    d = jax.nn.relu(mm(d, wd1) + bd1)
    d = jax.nn.relu(mm(d, wd2) + bd2)
    a = jnp.tanh(mm(d, wd3) + bd3)
    return a, mu, std


if __name__ == "__main__":
    # Small shapes consistent with the module.
    B, STATE_DIM, ACTION_DIM = 8, 8, 4
    HIDDEN = (32, 32)
    LATENT = 8

    key = jax.random.PRNGKey(0)
    k_s, k_a, k_e, k_p, k_s2, k_a2, k_e2 = jax.random.split(key, 7)

    states = jax.random.normal(k_s, (B, STATE_DIM), jnp.float32)
    actions = jax.random.normal(k_a, (B, ACTION_DIM), jnp.float32)
    # torch.randn_like(mu) noise, generated host-side for determinism.
    eps = jax.random.normal(k_e, (B, LATENT), jnp.float32)
    params = init_params(k_p, STATE_DIM, ACTION_DIM, HIDDEN, LATENT)

    # 1) exact-path check: full f32 matmuls vs pure-JAX f32 reference.
    out_f32 = vae_forward(states, actions, eps, params, matmul_dtype=jnp.float32)
    jax.block_until_ready(out_f32)
    ref_f32 = reference_forward(states, actions, eps, params, mm_dtype=jnp.float32)
    for o, r in zip(out_f32, ref_f32):
        assert jnp.allclose(o, r, atol=1e-5, rtol=1e-5)

    # 2) default path: bf16 matmul operands, f32 accumulation + elementwise.
    out_bf = vae_forward(states, actions, eps, params)
    jax.block_until_ready(out_bf)
    ref_bf = reference_forward(states, actions, eps, params, mm_dtype=jnp.bfloat16)
    for o, r in zip(out_bf, ref_bf):
        assert jnp.allclose(o, r, atol=5e-3, rtol=5e-3)
    for o, r in zip(out_bf, ref_f32):          # loose sanity vs full-f32 math
        assert jnp.allclose(o, r, atol=5e-2, rtol=5e-2)

    # 3) larger batch: exercises batch padding + multi-step parallel grid.
    B2 = 200
    states2 = jax.random.normal(k_s2, (B2, STATE_DIM), jnp.float32)
    actions2 = jax.random.normal(k_a2, (B2, ACTION_DIM), jnp.float32)
    eps2 = jax.random.normal(k_e2, (B2, LATENT), jnp.float32)
    out2 = vae_forward(states2, actions2, eps2, params, block_b=64)
    jax.block_until_ready(out2)
    ref2 = reference_forward(states2, actions2, eps2, params, mm_dtype=jnp.bfloat16)
    for o, r in zip(out2, ref2):
        assert jnp.allclose(o, r, atol=5e-3, rtol=5e-3)

    print("KERNEL_OK")
</pallas_src>

<mosaic_0001>
module attributes {stable_mosaic.version = 11 : i64} {
  func.func @_vae_kernel(%arg0: i32, %arg1: memref<8x8xf32, #tpu.memory_space<vmem>>, %arg2: memref<8x4xf32, #tpu.memory_space<vmem>>, %arg3: memref<8x8xf32, #tpu.memory_space<vmem>>, %arg4: memref<8x32xf32, #tpu.memory_space<vmem>>, %arg5: memref<4x32xf32, #tpu.memory_space<vmem>>, %arg6: memref<32x32xf32, #tpu.memory_space<vmem>>, %arg7: memref<32x16xf32, #tpu.memory_space<vmem>>, %arg8: memref<8x32xf32, #tpu.memory_space<vmem>>, %arg9: memref<8x32xf32, #tpu.memory_space<vmem>>, %arg10: memref<32x32xf32, #tpu.memory_space<vmem>>, %arg11: memref<32x4xf32, #tpu.memory_space<vmem>>, %arg12: memref<6x32xf32, #tpu.memory_space<vmem>>, %arg13: memref<8x128xf32, #tpu.memory_space<vmem>>) attributes {dimension_semantics = [#tpu.dimension_semantics<parallel>], iteration_bounds = array<i64: 1>, scalar_prefetch = 0 : i64, scratch_operands = 0 : i64, tpu.core_type = #tpu.core_type<tc>, window_params = [{transform_indices = @transform_0, window_bounds = array<i64: 8, 8>}, {transform_indices = @transform_1, window_bounds = array<i64: 8, 4>}, {transform_indices = @transform_2, window_bounds = array<i64: 8, 8>}, {pipeline_mode = #tpu.pipeline_mode<synchronous>, transform_indices = @transform_3, window_bounds = array<i64: 8, 32>}, {pipeline_mode = #tpu.pipeline_mode<synchronous>, transform_indices = @transform_4, window_bounds = array<i64: 4, 32>}, {pipeline_mode = #tpu.pipeline_mode<synchronous>, transform_indices = @transform_5, window_bounds = array<i64: 32, 32>}, {pipeline_mode = #tpu.pipeline_mode<synchronous>, transform_indices = @transform_6, window_bounds = array<i64: 32, 16>}, {pipeline_mode = #tpu.pipeline_mode<synchronous>, transform_indices = @transform_7, window_bounds = array<i64: 8, 32>}, {pipeline_mode = #tpu.pipeline_mode<synchronous>, transform_indices = @transform_8, window_bounds = array<i64: 8, 32>}, {pipeline_mode = #tpu.pipeline_mode<synchronous>, transform_indices = @transform_9, window_bounds = array<i64: 32, 32>}, {pipeline_mode = #tpu.pipeline_mode<synchronous>, transform_indices = @transform_10, window_bounds = array<i64: 32, 4>}, {pipeline_mode = #tpu.pipeline_mode<synchronous>, transform_indices = @transform_11, window_bounds = array<i64: 6, 32>}, {transform_indices = @transform_12, window_bounds = array<i64: 8, 128>}]} {
    %c0 = arith.constant 0 : index
    %c0_0 = arith.constant 0 : index
    %0 = vector.load %arg1[%c0, %c0_0] : memref<8x8xf32, #tpu.memory_space<vmem>>, vector<8x8xf32>
    %c0_1 = arith.constant 0 : index
    %c0_2 = arith.constant 0 : index
    %1 = vector.load %arg2[%c0_1, %c0_2] : memref<8x4xf32, #tpu.memory_space<vmem>>, vector<8x4xf32>
    %c0_3 = arith.constant 0 : index
    %c0_4 = arith.constant 0 : index
    %2 = vector.load %arg3[%c0_3, %c0_4] : memref<8x8xf32, #tpu.memory_space<vmem>>, vector<8x8xf32>
    %c0_5 = arith.constant 0 : index
    %c0_6 = arith.constant 0 : index
    %3 = vector.load %arg12[%c0_5, %c0_6] : memref<6x32xf32, #tpu.memory_space<vmem>>, vector<6x32xf32>
    %4 = vector.extract_strided_slice %3 {offsets = [0, 0], sizes = [1, 32], strides = [1, 1]} : vector<6x32xf32> to vector<1x32xf32>
    %5 = vector.extract_strided_slice %3 {offsets = [1, 0], sizes = [1, 32], strides = [1, 1]} : vector<6x32xf32> to vector<1x32xf32>
    %6 = vector.extract_strided_slice %3 {offsets = [2, 0], sizes = [1, 16], strides = [1, 1]} : vector<6x32xf32> to vector<1x16xf32>
    %7 = vector.extract_strided_slice %3 {offsets = [3, 0], sizes = [1, 32], strides = [1, 1]} : vector<6x32xf32> to vector<1x32xf32>
    %8 = vector.extract_strided_slice %3 {offsets = [4, 0], sizes = [1, 32], strides = [1, 1]} : vector<6x32xf32> to vector<1x32xf32>
    %9 = vector.extract_strided_slice %3 {offsets = [5, 0], sizes = [1, 4], strides = [1, 1]} : vector<6x32xf32> to vector<1x4xf32>
    %c0_7 = arith.constant 0 : index
    %c0_8 = arith.constant 0 : index
    %10 = vector.load %arg4[%c0_7, %c0_8] : memref<8x32xf32, #tpu.memory_space<vmem>>, vector<8x32xf32>
    %cst = arith.constant dense<0.000000e+00> : vector<8x32xf32>
    %11 = tpu.matmul %0, %10, %cst {dimension_numbers = #tpu.dot_dimension_numbers<[1], [0], [0], [1], [0, 0, 1, 1], [], []>} : vector<8x8xf32>, vector<8x32xf32>, vector<8x32xf32> -> vector<8x32xf32>
    %c0_9 = arith.constant 0 : index
    %c0_10 = arith.constant 0 : index
    %12 = vector.load %arg5[%c0_9, %c0_10] : memref<4x32xf32, #tpu.memory_space<vmem>>, vector<4x32xf32>
    %cst_11 = arith.constant dense<0.000000e+00> : vector<8x32xf32>
    %13 = tpu.matmul %1, %12, %cst_11 {dimension_numbers = #tpu.dot_dimension_numbers<[1], [0], [0], [1], [0, 0, 1, 1], [], []>} : vector<8x4xf32>, vector<4x32xf32>, vector<8x32xf32> -> vector<8x32xf32>
    %14 = arith.addf %11, %13 : vector<8x32xf32>
    %15 = vector.broadcast %4 : vector<1x32xf32> to vector<8x32xf32>
    %16 = arith.addf %14, %15 : vector<8x32xf32>
    %cst_12 = arith.constant 0.000000e+00 : f32
    %17 = vector.broadcast %cst_12 : f32 to vector<8x32xf32>
    %18 = arith.maximumf %16, %17 : vector<8x32xf32>
    %c0_13 = arith.constant 0 : index
    %c0_14 = arith.constant 0 : index
    %19 = vector.load %arg6[%c0_13, %c0_14] : memref<32x32xf32, #tpu.memory_space<vmem>>, vector<32x32xf32>
    %cst_15 = arith.constant dense<0.000000e+00> : vector<8x32xf32>
    %20 = tpu.matmul %18, %19, %cst_15 {dimension_numbers = #tpu.dot_dimension_numbers<[1], [0], [0], [1], [0, 0, 1, 1], [], []>} : vector<8x32xf32>, vector<32x32xf32>, vector<8x32xf32> -> vector<8x32xf32>
    %21 = vector.broadcast %5 : vector<1x32xf32> to vector<8x32xf32>
    %22 = arith.addf %20, %21 : vector<8x32xf32>
    %cst_16 = arith.constant 0.000000e+00 : f32
    %23 = vector.broadcast %cst_16 : f32 to vector<8x32xf32>
    %24 = arith.maximumf %22, %23 : vector<8x32xf32>
    %c0_17 = arith.constant 0 : index
    %c0_18 = arith.constant 0 : index
    %25 = vector.load %arg7[%c0_17, %c0_18] : memref<32x16xf32, #tpu.memory_space<vmem>>, vector<32x16xf32>
    %cst_19 = arith.constant dense<0.000000e+00> : vector<8x16xf32>
    %26 = tpu.matmul %24, %25, %cst_19 {dimension_numbers = #tpu.dot_dimension_numbers<[1], [0], [0], [1], [0, 0, 1, 1], [], []>} : vector<8x32xf32>, vector<32x16xf32>, vector<8x16xf32> -> vector<8x16xf32>
    %27 = vector.broadcast %6 : vector<1x16xf32> to vector<8x16xf32>
    %28 = arith.addf %26, %27 : vector<8x16xf32>
    %29 = vector.extract_strided_slice %28 {offsets = [0, 0], sizes = [8, 8], strides = [1, 1]} : vector<8x16xf32> to vector<8x8xf32>
    %30 = vector.extract_strided_slice %28 {offsets = [0, 8], sizes = [8, 8], strides = [1, 1]} : vector<8x16xf32> to vector<8x8xf32>
    %cst_20 = arith.constant -4.000000e+00 : f32
    %cst_21 = arith.constant 1.500000e+01 : f32
    %31 = vector.broadcast %cst_20 : f32 to vector<8x8xf32>
    %32 = arith.maximumf %31, %30 : vector<8x8xf32>
    %33 = vector.broadcast %cst_21 : f32 to vector<8x8xf32>
    %34 = arith.minimumf %33, %32 : vector<8x8xf32>
    %35 = math.exp %34 : vector<8x8xf32>
    %36 = arith.mulf %35, %2 : vector<8x8xf32>
    %37 = arith.addf %29, %36 : vector<8x8xf32>
    %c0_22 = arith.constant 0 : index
    %c0_23 = arith.constant 0 : index
    %38 = vector.load %arg8[%c0_22, %c0_23] : memref<8x32xf32, #tpu.memory_space<vmem>>, vector<8x32xf32>
    %cst_24 = arith.constant dense<0.000000e+00> : vector<8x32xf32>
    %39 = tpu.matmul %0, %38, %cst_24 {dimension_numbers = #tpu.dot_dimension_numbers<[1], [0], [0], [1], [0, 0, 1, 1], [], []>} : vector<8x8xf32>, vector<8x32xf32>, vector<8x32xf32> -> vector<8x32xf32>
    %c0_25 = arith.constant 0 : index
    %c0_26 = arith.constant 0 : index
    %40 = vector.load %arg9[%c0_25, %c0_26] : memref<8x32xf32, #tpu.memory_space<vmem>>, vector<8x32xf32>
    %cst_27 = arith.constant dense<0.000000e+00> : vector<8x32xf32>
    %41 = tpu.matmul %37, %40, %cst_27 {dimension_numbers = #tpu.dot_dimension_numbers<[1], [0], [0], [1], [0, 0, 1, 1], [], []>} : vector<8x8xf32>, vector<8x32xf32>, vector<8x32xf32> -> vector<8x32xf32>
    %42 = arith.addf %39, %41 : vector<8x32xf32>
    %43 = vector.broadcast %7 : vector<1x32xf32> to vector<8x32xf32>
    %44 = arith.addf %42, %43 : vector<8x32xf32>
    %cst_28 = arith.constant 0.000000e+00 : f32
    %45 = vector.broadcast %cst_28 : f32 to vector<8x32xf32>
    %46 = arith.maximumf %44, %45 : vector<8x32xf32>
    %c0_29 = arith.constant 0 : index
    %c0_30 = arith.constant 0 : index
    %47 = vector.load %arg10[%c0_29, %c0_30] : memref<32x32xf32, #tpu.memory_space<vmem>>, vector<32x32xf32>
    %cst_31 = arith.constant dense<0.000000e+00> : vector<8x32xf32>
    %48 = tpu.matmul %46, %47, %cst_31 {dimension_numbers = #tpu.dot_dimension_numbers<[1], [0], [0], [1], [0, 0, 1, 1], [], []>} : vector<8x32xf32>, vector<32x32xf32>, vector<8x32xf32> -> vector<8x32xf32>
    %49 = vector.broadcast %8 : vector<1x32xf32> to vector<8x32xf32>
    %50 = arith.addf %48, %49 : vector<8x32xf32>
    %cst_32 = arith.constant 0.000000e+00 : f32
    %51 = vector.broadcast %cst_32 : f32 to vector<8x32xf32>
    %52 = arith.maximumf %50, %51 : vector<8x32xf32>
    %c0_33 = arith.constant 0 : index
    %c0_34 = arith.constant 0 : index
    %53 = vector.load %arg11[%c0_33, %c0_34] : memref<32x4xf32, #tpu.memory_space<vmem>>, vector<32x4xf32>
    %cst_35 = arith.constant dense<0.000000e+00> : vector<8x4xf32>
    %54 = tpu.matmul %52, %53, %cst_35 {dimension_numbers = #tpu.dot_dimension_numbers<[1], [0], [0], [1], [0, 0, 1, 1], [], []>} : vector<8x32xf32>, vector<32x4xf32>, vector<8x4xf32> -> vector<8x4xf32>
    %55 = vector.broadcast %9 : vector<1x4xf32> to vector<8x4xf32>
    %56 = arith.addf %54, %55 : vector<8x4xf32>
    %57 = math.tanh %56 : vector<8x4xf32>
    %cst_36 = arith.constant 0.000000e+00 : f32
    %58 = vector.broadcast %cst_36 : f32 to vector<8x108xf32>
    %59 = tpu.concatenate %57, %29, %35, %58 in 1 : vector<8x4xf32>, vector<8x8xf32>, vector<8x8xf32>, vector<8x108xf32> -> vector<8x128xf32>
    %c0_37 = arith.constant 0 : index
    %c0_38 = arith.constant 0 : index
    %60 = vector.load %arg13[%c0_37, %c0_38] : memref<8x128xf32, #tpu.memory_space<vmem>>, vector<8x128xf32>
    tpu.vector_store %arg13[%c0_37, %c0_38], %59 {strides = array<i32>} : memref<8x128xf32, #tpu.memory_space<vmem>>, vector<8x128xf32>,
    return
  }
  func.func @transform_0(%arg0: i32) -> (i32, i32) {
    %c0_i32 = arith.constant 0 : i32
    %c0_i32_0 = arith.constant 0 : i32
    return %arg0, %c0_i32 : i32, i32
  }
  func.func @transform_1(%arg0: i32) -> (i32, i32) {
    %c0_i32 = arith.constant 0 : i32
    %c0_i32_0 = arith.constant 0 : i32
    return %arg0, %c0_i32 : i32, i32
  }
  func.func @transform_2(%arg0: i32) -> (i32, i32) {
    %c0_i32 = arith.constant 0 : i32
    %c0_i32_0 = arith.constant 0 : i32
    return %arg0, %c0_i32 : i32, i32
  }
  func.func @transform_3(%arg0: i32) -> (i32, i32) {
    %c0_i32 = arith.constant 0 : i32
    %c0_i32_0 = arith.constant 0 : i32
    %c0_i32_1 = arith.constant 0 : i32
    return %c0_i32, %c0_i32_0 : i32, i32
  }
  func.func @transform_4(%arg0: i32) -> (i32, i32) {
    %c0_i32 = arith.constant 0 : i32
    %c0_i32_0 = arith.constant 0 : i32
    %c0_i32_1 = arith.constant 0 : i32
    return %c0_i32, %c0_i32_0 : i32, i32
  }
  func.func @transform_5(%arg0: i32) -> (i32, i32) {
    %c0_i32 = arith.constant 0 : i32
    %c0_i32_0 = arith.constant 0 : i32
    %c0_i32_1 = arith.constant 0 : i32
    return %c0_i32, %c0_i32_0 : i32, i32
  }
  func.func @transform_6(%arg0: i32) -> (i32, i32) {
    %c0_i32 = arith.constant 0 : i32
    %c0_i32_0 = arith.constant 0 : i32
    %c0_i32_1 = arith.constant 0 : i32
    return %c0_i32, %c0_i32_0 : i32, i32
  }
  func.func @transform_7(%arg0: i32) -> (i32, i32) {
    %c0_i32 = arith.constant 0 : i32
    %c0_i32_0 = arith.constant 0 : i32
    %c0_i32_1 = arith.constant 0 : i32
    return %c0_i32, %c0_i32_0 : i32, i32
  }
  func.func @transform_8(%arg0: i32) -> (i32, i32) {
    %c0_i32 = arith.constant 0 : i32
    %c0_i32_0 = arith.constant 0 : i32
    %c0_i32_1 = arith.constant 0 : i32
    return %c0_i32, %c0_i32_0 : i32, i32
  }
  func.func @transform_9(%arg0: i32) -> (i32, i32) {
    %c0_i32 = arith.constant 0 : i32
    %c0_i32_0 = arith.constant 0 : i32
    %c0_i32_1 = arith.constant 0 : i32
    return %c0_i32, %c0_i32_0 : i32, i32
  }
  func.func @transform_10(%arg0: i32) -> (i32, i32) {
    %c0_i32 = arith.constant 0 : i32
    %c0_i32_0 = arith.constant 0 : i32
    %c0_i32_1 = arith.constant 0 : i32
    return %c0_i32, %c0_i32_0 : i32, i32
  }
  func.func @transform_11(%arg0: i32) -> (i32, i32) {
    %c0_i32 = arith.constant 0 : i32
    %c0_i32_0 = arith.constant 0 : i32
    %c0_i32_1 = arith.constant 0 : i32
    return %c0_i32, %c0_i32_0 : i32, i32
  }
  func.func @transform_12(%arg0: i32) -> (i32, i32) {
    %c0_i32 = arith.constant 0 : i32
    %c0_i32_0 = arith.constant 0 : i32
    return %arg0, %c0_i32 : i32, i32
  }
}

</mosaic_0001>

<llo_original>
// kernel: tpu_custom_call.1
$region0: #{tpu_custom_call.1}
  #allocation0 [shape = 'u32[]', space=smem, size = 0x4, offset = 0x4, fixed_abs, tag = 'smem constant byte address 0x4 - core index']
  #allocation1 [shape = 'u32[72,128]{1,0:T(1,128)}', space=vmem, size = 0x9000, scoped, tag = 'internal scratch']
  %s0 = inlined_call_operand.vmem [shape: f32[8,8], index: 0, kind: input, shape index: {}]
  %s1 = inlined_call_operand.vmem [shape: f32[8,4], index: 1, kind: input, shape index: {}]
  %s2 = inlined_call_operand.vmem [shape: f32[8,8], index: 2, kind: input, shape index: {}]
  %s3 = inlined_call_operand.hbm [shape: f32[8,32], index: 3, kind: input, shape index: {}]
  %s4 = inlined_call_operand.hbm [shape: f32[4,32], index: 4, kind: input, shape index: {}]
  %s5 = inlined_call_operand.vmem [shape: f32[32,32], index: 5, kind: input, shape index: {}]
  %s6 = inlined_call_operand.vmem [shape: f32[32,16], index: 6, kind: input, shape index: {}]
  %s7 = inlined_call_operand.hbm [shape: f32[8,32], index: 7, kind: input, shape index: {}]
  %s8 = inlined_call_operand.hbm [shape: f32[8,32], index: 8, kind: input, shape index: {}]
  %s9 = inlined_call_operand.vmem [shape: f32[32,32], index: 9, kind: input, shape index: {}]
  %s10 = inlined_call_operand.vmem [shape: f32[32,4], index: 10, kind: input, shape index: {}]
  %s11 = inlined_call_operand.hbm [shape: f32[6,32], index: 11, kind: input, shape index: {}]
  %s12 = inlined_call_operand.hbm [shape: f32[8,128], index: 12, kind: output, shape index: {}]
  %s13 = sld [smem:[#allocation0]]
  $region78: #{tpu_custom_call.1} parent=0
    _
  %s15 = ssub.s32 1, %s13
  %s16 = scalar_select 0, %s15, %s13
  $region1: #{tpu_custom_call.1} parent=0
    #allocation2 [shape = 'u8[4096]{0}', space=vmem, size = 0x1000, scoped, tag = 'input window, operand 3, single buffered']
    #allocation3 [shape = 's32[1]{0}', space=sflag, size = 0x4, scoped, tag = 'scoped memory for tpu_custom_call.1']
    #allocation4 [shape = 's32[1]{0}', space=sflag, size = 0x4, scoped, tag = 'scoped memory for tpu_custom_call.1']
    #allocation5 [shape = 'u8[2048]{0}', space=vmem, size = 0x800, scoped, tag = 'input window, operand 4, single buffered']
    #allocation6 [shape = 's32[1]{0}', space=sflag, size = 0x4, scoped, tag = 'scoped memory for tpu_custom_call.1']
    #allocation7 [shape = 'u8[4096]{0}', space=vmem, size = 0x1000, scoped, tag = 'input window, operand 7, single buffered']
    #allocation8 [shape = 'u8[4096]{0}', space=vmem, size = 0x1000, scoped, tag = 'input window, operand 8, single buffered']
    #allocation9 [shape = 's32[1]{0}', space=sflag, size = 0x4, scoped, tag = 'scoped memory for tpu_custom_call.1']
    #allocation10 [shape = 'u8[4096]{0}', space=vmem, size = 0x1000, scoped, tag = 'input window, operand 11, single buffered']
    #allocation11 [shape = 'u8[4096]{0}', space=vmem, size = 0x1000, scoped, tag = 'output window, operand 0, single buffered']
    %17 = vsyncpa [#allocation3], 0
    %18 = vsyncpa [#allocation6], 0
    %19 = vsyncpa [#allocation9], 0
    %20 = vsyncpa [#allocation4], 0
    // Predicated region
    $region2: #{tpu_custom_call.1} parent=1 // pred_check
      _
    $region3: #{tpu_custom_call.1} parent=1 // pred_check_branch
      %22 = sbr.rel (0) target = $region5
    $region4: #{tpu_custom_call.1} parent=1 // pred_region
      _
    $region5: #{tpu_custom_call.1} parent=1 // pred_fallthru
      _
    // Predicated region
    $region6: #{tpu_custom_call.1} parent=1 // pred_check
      _
    $region7: #{tpu_custom_call.1} parent=1 // pred_check_branch
      %24 = sbr.rel (0) target = $region9
    $region8: #{tpu_custom_call.1} parent=1 // pred_region
      _
    $region9: #{tpu_custom_call.1} parent=1 // pred_fallthru
      _
    // Predicated region
    $region10: #{tpu_custom_call.1} parent=1 // pred_check
      _
    $region11: #{tpu_custom_call.1} parent=1 // pred_check_branch
      %26 = sbr.rel (0) target = $region13
    $region12: #{tpu_custom_call.1} parent=1 // pred_region
      _
    $region13: #{tpu_custom_call.1} parent=1 // pred_fallthru
      _
    // Predicated region
    $region14: #{tpu_custom_call.1} parent=1 // pred_check
      _
    $region15: #{tpu_custom_call.1} parent=1 // pred_check_branch
      %28 = sbr.rel (0) target = $region17
    $region16: #{tpu_custom_call.1} parent=1 // pred_region
      %30 = vsyncadd [#allocation3], 0
      %s32 = sshll.u32 %s3, 4
      %s33 = int_to_ptr.hbm [resolvable:$true] %s32
      %s34 = sshll.u32 [#allocation2], 4
      %s35 = int_to_ptr.vmem [resolvable:$true] %s34
      %37 = dma.hbm_to_vmem [thread:$0]  %s33, 128, %s35, [#allocation3]
    $region17: #{tpu_custom_call.1} parent=1 // pred_fallthru
      _
    // Predicated region
    $region18: #{tpu_custom_call.1} parent=1 // pred_check
      _
    $region19: #{tpu_custom_call.1} parent=1 // pred_check_branch
      %39 = sbr.rel (0) target = $region21
    $region20: #{tpu_custom_call.1} parent=1 // pred_region
      %41 = vsyncadd [#allocation6], 0
      %s43 = sshll.u32 %s4, 4
      %s44 = int_to_ptr.hbm [resolvable:$true] %s43
      %s45 = sshll.u32 [#allocation5], 4
      %s46 = int_to_ptr.vmem [resolvable:$true] %s45
      %48 = dma.hbm_to_vmem [thread:$0]  %s44, 64, %s46, [#allocation6]
    $region21: #{tpu_custom_call.1} parent=1 // pred_fallthru
      _
    // Predicated region
    $region22: #{tpu_custom_call.1} parent=1 // pred_check
      _
    $region23: #{tpu_custom_call.1} parent=1 // pred_check_branch
      %50 = sbr.rel (0) target = $region25
    $region24: #{tpu_custom_call.1} parent=1 // pred_region
      _
    $region25: #{tpu_custom_call.1} parent=1 // pred_fallthru
      _
    // Predicated region
    $region26: #{tpu_custom_call.1} parent=1 // pred_check
      _
    $region27: #{tpu_custom_call.1} parent=1 // pred_check_branch
      %52 = sbr.rel (0) target = $region29
    $region28: #{tpu_custom_call.1} parent=1 // pred_region
      _
    $region29: #{tpu_custom_call.1} parent=1 // pred_fallthru
      _
    // Predicated region
    $region30: #{tpu_custom_call.1} parent=1 // pred_check
      _
    $region31: #{tpu_custom_call.1} parent=1 // pred_check_branch
      %54 = sbr.rel (0) target = $region33
    $region32: #{tpu_custom_call.1} parent=1 // pred_region
      %56 = vsyncadd [#allocation6], 0
      %s58 = sshll.u32 %s7, 4
      %s59 = int_to_ptr.hbm [resolvable:$true] %s58
      %s60 = sshll.u32 [#allocation7], 4
      %s61 = int_to_ptr.vmem [resolvable:$true] %s60
      %63 = dma.hbm_to_vmem [thread:$0]  %s59, 128, %s61, [#allocation6]
    $region33: #{tpu_custom_call.1} parent=1 // pred_fallthru
      _
    // Predicated region
    $region34: #{tpu_custom_call.1} parent=1 // pred_check
      _
    $region35: #{tpu_custom_call.1} parent=1 // pred_check_branch
      %65 = sbr.rel (0) target = $region37
    $region36: #{tpu_custom_call.1} parent=1 // pred_region
      %67 = vsyncadd [#allocation9], 0
      %s69 = sshll.u32 %s8, 4
      %s70 = int_to_ptr.hbm [resolvable:$true] %s69
      %s71 = sshll.u32 [#allocation8], 4
      %s72 = int_to_ptr.vmem [resolvable:$true] %s71
      %74 = dma.hbm_to_vmem [thread:$0]  %s70, 128, %s72, [#allocation9]
    $region37: #{tpu_custom_call.1} parent=1 // pred_fallthru
      _
    // Predicated region
    $region38: #{tpu_custom_call.1} parent=1 // pred_check
      _
    $region39: #{tpu_custom_call.1} parent=1 // pred_check_branch
      %76 = sbr.rel (0) target = $region41
    $region40: #{tpu_custom_call.1} parent=1 // pred_region
      _
    $region41: #{tpu_custom_call.1} parent=1 // pred_fallthru
      _
    // Predicated region
    $region42: #{tpu_custom_call.1} parent=1 // pred_check
      _
    $region43: #{tpu_custom_call.1} parent=1 // pred_check_branch
      %78 = sbr.rel (0) target = $region45
    $region44: #{tpu_custom_call.1} parent=1 // pred_region
      _
    $region45: #{tpu_custom_call.1} parent=1 // pred_fallthru
      _
    // Predicated region
    $region46: #{tpu_custom_call.1} parent=1 // pred_check
      _
    $region47: #{tpu_custom_call.1} parent=1 // pred_check_branch
      %80 = sbr.rel (0) target = $region49
    $region48: #{tpu_custom_call.1} parent=1 // pred_region
      %82 = vsyncadd [#allocation9], 0
      %s84 = sshll.u32 %s11, 4
      %s85 = int_to_ptr.hbm [resolvable:$true] %s84
      %s86 = sshll.u32 [#allocation10], 4
      %s87 = int_to_ptr.vmem [resolvable:$true] %s86
      %89 = dma.hbm_to_vmem [thread:$0]  %s85, 128, %s87, [#allocation9]
    $region49: #{tpu_custom_call.1} parent=1 // pred_fallthru
      _
    // Predicated region
    $region50: #{tpu_custom_call.1} parent=1 // pred_check
      _
    $region51: #{tpu_custom_call.1} parent=1 // pred_check_branch
      %91 = sbr.rel (0) target = $region53
    $region52: #{tpu_custom_call.1} parent=1 // pred_region
      %93 = dma.done [#allocation3], 128
    $region53: #{tpu_custom_call.1} parent=1 // pred_fallthru
      _
    // Predicated region
    $region54: #{tpu_custom_call.1} parent=1 // pred_check
      _
    $region55: #{tpu_custom_call.1} parent=1 // pred_check_branch
      %95 = sbr.rel (0) target = $region57
    $region56: #{tpu_custom_call.1} parent=1 // pred_region
      %97 = dma.done [#allocation6], 64
    $region57: #{tpu_custom_call.1} parent=1 // pred_fallthru
      _
    // Predicated region
    $region58: #{tpu_custom_call.1} parent=1 // pred_check
      _
    $region59: #{tpu_custom_call.1} parent=1 // pred_check_branch
      %99 = sbr.rel (0) target = $region61
    $region60: #{tpu_custom_call.1} parent=1 // pred_region
      %101 = dma.done [#allocation6], 128
    $region61: #{tpu_custom_call.1} parent=1 // pred_fallthru
      _
    // Predicated region
    $region62: #{tpu_custom_call.1} parent=1 // pred_check
      _
    $region63: #{tpu_custom_call.1} parent=1 // pred_check_branch
      %103 = sbr.rel (0) target = $region65
    $region64: #{tpu_custom_call.1} parent=1 // pred_region
      %105 = dma.done [#allocation9], 128
    $region65: #{tpu_custom_call.1} parent=1 // pred_fallthru
      _
    // Predicated region
    $region66: #{tpu_custom_call.1} parent=1 // pred_check
      _
    $region67: #{tpu_custom_call.1} parent=1 // pred_check_branch
      %107 = sbr.rel (0) target = $region69
    $region68: #{tpu_custom_call.1} parent=1 // pred_region
      %109 = dma.done [#allocation9], 128
    $region69: #{tpu_custom_call.1} parent=1 // pred_fallthru
      _
    %v110 = vld [vmem:[%s0] sm:$0xff]
    %v111 = vld [vmem:[%s1] sm:$0xff]
    %v112 = vld [vmem:[%s2] sm:$0xff]
    %v113 = vld [vmem:[#allocation10] sm:$0x3f]
    %v114 = vld [vmem:[#allocation2] sm:$0xff]
    %v115 = vld [vmem:[#allocation5] sm:$0xf]
    %vm116 = vcmask 31744
    %v118 = vsel %vm116, %v111, 0
    %vm120 = vcmask 1043456
    %v122 = vsel %vm120, %v115, 0
    %124 = vmatpush.msra.mxu0 0.0
    %125 = vmatpush.msra.mxu0 0.0
    %126 = vmatpush.msra.mxu0 0.0
    %127 = vmatpush.msra.mxu0 0.0
    %128 = vmatpush.msra.mxu0 0.0
    %129 = vmatpush.msra.mxu0 0.0
    %130 = vmatpush.msra.mxu0 0.0
    %131 = vmatpush.msra.mxu0 0.0
    %132 = vmatpush.msra.mxu0 0.0
    %133 = vmatpush.msra.mxu0 0.0
    %134 = vmatpush.msra.mxu0 0.0
    %135 = vmatpush.msra.mxu0 0.0
    %136 = vmatpush.msra.mxu0 0.0
    %137 = vmatpush.msra.mxu0 0.0
    %138 = vmatpush.msra.mxu0 0.0
    %139 = vmatpush.msra.mxu0 %v122
    %140 = vmatmul.f32.gmra.mxu0 %v118
    %v141 = vpop.f32.mrf.mxu0
    %v142 = vadd.f32 0.0, %v141
    %143 = vdwg.mxu0
    %vm144 = vcmask 64512
    %v146 = vsel %vm144, %v110, 0
    %148 = vmatpush.msra.mxu0 0.0
    %149 = vmatpush.msra.mxu0 0.0
    %150 = vmatpush.msra.mxu0 0.0
    %151 = vmatpush.msra.mxu0 0.0
    %152 = vmatpush.msra.mxu0 0.0
    %153 = vmatpush.msra.mxu0 0.0
    %154 = vmatpush.msra.mxu0 0.0
    %155 = vmatpush.msra.mxu0 0.0
    %156 = vmatpush.msra.mxu0 0.0
    %157 = vmatpush.msra.mxu0 0.0
    %158 = vmatpush.msra.mxu0 0.0
    %159 = vmatpush.msra.mxu0 0.0
    %160 = vmatpush.msra.mxu0 0.0
    %161 = vmatpush.msra.mxu0 0.0
    %162 = vmatpush.msra.mxu0 0.0
    %163 = vmatpush.msra.mxu0 %v114
    %164 = vmatmul.f32.gmra.mxu0 %v146
    %v165 = vpop.f32.mrf.mxu0
    %v166 = vadd.f32 %v142, %v165
    %167 = vdwg.mxu0
    %v168 = vperm.slane %v113, 0
    %v169 = vadd.f32 %v166, %v168
    %v170 = vmax.f32 %v169, 0.0
    %v171 = vld [vmem:[%s5] sm:$0xff]
    %v172 = vld [vmem:[%s5 + $0x8] sm:$0xff]
    %v173 = vld [vmem:[%s5 + $0x10] sm:$0xff]
    %v174 = vld [vmem:[%s5 + $0x18] sm:$0xff]
    %v175 = vperm.slane %v113, 1
    %vm176 = vcmask 261120
    %v178 = vsel %vm176, %v170, 0
    %180 = vmatpush.msra.mxu0 0.0
    %181 = vmatpush.msra.mxu0 0.0
    %182 = vmatpush.msra.mxu0 0.0
    %183 = vmatpush.msra.mxu0 0.0
    %184 = vmatpush.msra.mxu0 0.0
    %185 = vmatpush.msra.mxu0 0.0
    %186 = vmatpush.msra.mxu0 0.0
    %187 = vmatpush.msra.mxu0 0.0
    %188 = vmatpush.msra.mxu0 0.0
    %189 = vmatpush.msra.mxu0 0.0
    %190 = vmatpush.msra.mxu0 0.0
    %191 = vmatpush.msra.mxu0 0.0
    %192 = vmatpush.msra.mxu0 %v174
    %193 = vmatpush.msra.mxu0 %v173
    %194 = vmatpush.msra.mxu0 %v172
    %195 = vmatpush.msra.mxu0 %v171
    %196 = vmatmul.f32.gmra.mxu0 %v178
    %v197 = vpop.f32.mrf.mxu0
    %v198 = vadd.f32 %v175, %v197
    %199 = vdwg.mxu0
    %v200 = vmax.f32 %v198, 0.0
    %v201 = vld [vmem:[%s6] sm:$0xff]
    %v202 = vld [vmem:[%s6 + $0x8] sm:$0xff]
    %v203 = vld [vmem:[%s6 + $0x10] sm:$0xff]
    %v204 = vld [vmem:[%s6 + $0x18] sm:$0xff]
    %v205 = vperm.slane %v113, 2
    %v207 = vsel %vm176, %v200, 0
    %209 = vmatpush.msra.mxu0 0.0
    %210 = vmatpush.msra.mxu0 0.0
    %211 = vmatpush.msra.mxu0 0.0
    %212 = vmatpush.msra.mxu0 0.0
    %213 = vmatpush.msra.mxu0 0.0
    %214 = vmatpush.msra.mxu0 0.0
    %215 = vmatpush.msra.mxu0 0.0
    %216 = vmatpush.msra.mxu0 0.0
    %217 = vmatpush.msra.mxu0 0.0
    %218 = vmatpush.msra.mxu0 0.0
    %219 = vmatpush.msra.mxu0 0.0
    %220 = vmatpush.msra.mxu0 0.0
    %221 = vmatpush.msra.mxu0 %v204
    %222 = vmatpush.msra.mxu0 %v203
    %223 = vmatpush.msra.mxu0 %v202
    %224 = vmatpush.msra.mxu0 %v201
    %225 = vmatmul.f32.gmra.mxu0 %v207
    %v226 = vpop.f32.mrf.mxu0
    %v227 = vadd.f32 %v205, %v226
    %228 = vdwg.mxu0
    %v229 = vmax.f32 %v227, -4.0
    %v230 = vmin.f32 %v229, 15.0
    %v231 = vmul.f32 %v230, 1.442695
    %v232 = vpow.pop %v231
    %234 = vrot.lane.b32.xlu0 %v112, 8
    %v235 = vpop.permute.xlu0 %234
    %v237 = vmul.f32 %v232, %v235
    %239 = vrot.lane.b32.xlu0 %v237, 120
    %v240 = vpop.permute.xlu0 %239
    %v242 = vadd.f32 %v227, %v240
    %v243 = vld [vmem:[#allocation7] sm:$0xff]
    %v244 = vld [vmem:[#allocation8] sm:$0xff]
    %v246 = vsel %vm144, %v242, 0
    %248 = vmatpush.msra.mxu0 0.0
    %249 = vmatpush.msra.mxu0 0.0
    %250 = vmatpush.msra.mxu0 0.0
    %251 = vmatpush.msra.mxu0 0.0
    %252 = vmatpush.msra.mxu0 0.0
    %253 = vmatpush.msra.mxu0 0.0
    %254 = vmatpush.msra.mxu0 0.0
    %255 = vmatpush.msra.mxu0 0.0
    %256 = vmatpush.msra.mxu0 0.0
    %257 = vmatpush.msra.mxu0 0.0
    %258 = vmatpush.msra.mxu0 0.0
    %259 = vmatpush.msra.mxu0 0.0
    %260 = vmatpush.msra.mxu0 0.0
    %261 = vmatpush.msra.mxu0 0.0
    %262 = vmatpush.msra.mxu0 0.0
    %263 = vmatpush.msra.mxu0 %v244
    %264 = vmatmul.f32.gmra.mxu0 %v246
    %v265 = vpop.f32.mrf.mxu0
    %v266 = vadd.f32 0.0, %v265
    %267 = vdwg.mxu0
    %268 = vmatpush.msra.mxu0 0.0
    %269 = vmatpush.msra.mxu0 0.0
    %270 = vmatpush.msra.mxu0 0.0
    %271 = vmatpush.msra.mxu0 0.0
    %272 = vmatpush.msra.mxu0 0.0
    %273 = vmatpush.msra.mxu0 0.0
    %274 = vmatpush.msra.mxu0 0.0
    %275 = vmatpush.msra.mxu0 0.0
    %276 = vmatpush.msra.mxu0 0.0
    %277 = vmatpush.msra.mxu0 0.0
    %278 = vmatpush.msra.mxu0 0.0
    %279 = vmatpush.msra.mxu0 0.0
    %280 = vmatpush.msra.mxu0 0.0
    %281 = vmatpush.msra.mxu0 0.0
    %282 = vmatpush.msra.mxu0 0.0
    %283 = vmatpush.msra.mxu0 %v243
    %284 = vmatmul.f32.gmra.mxu0 %v146
    %v285 = vpop.f32.mrf.mxu0
    %v286 = vadd.f32 %v266, %v285
    %287 = vdwg.mxu0
    %v288 = vperm.slane %v113, 3
    %v289 = vadd.f32 %v286, %v288
    %v290 = vmax.f32 %v289, 0.0
    %v291 = vld [vmem:[%s9] sm:$0xff]
    %v292 = vld [vmem:[%s9 + $0x8] sm:$0xff]
    %v293 = vld [vmem:[%s9 + $0x10] sm:$0xff]
    %v294 = vld [vmem:[%s9 + $0x18] sm:$0xff]
    %v295 = vperm.slane %v113, 4
    %v297 = vsel %vm176, %v290, 0
    %299 = vmatpush.msra.mxu0 0.0
    %300 = vmatpush.msra.mxu0 0.0
    %301 = vmatpush.msra.mxu0 0.0
    %302 = vmatpush.msra.mxu0 0.0
    %303 = vmatpush.msra.mxu0 0.0
    %304 = vmatpush.msra.mxu0 0.0
    %305 = vmatpush.msra.mxu0 0.0
    %306 = vmatpush.msra.mxu0 0.0
    %307 = vmatpush.msra.mxu0 0.0
    %308 = vmatpush.msra.mxu0 0.0
    %309 = vmatpush.msra.mxu0 0.0
    %310 = vmatpush.msra.mxu0 0.0
    %311 = vmatpush.msra.mxu0 %v294
    %312 = vmatpush.msra.mxu0 %v293
    %313 = vmatpush.msra.mxu0 %v292
    %314 = vmatpush.msra.mxu0 %v291
    %315 = vmatmul.f32.gmra.mxu0 %v297
    %v316 = vpop.f32.mrf.mxu0
    %v317 = vadd.f32 %v295, %v316
    %318 = vdwg.mxu0
    %v319 = vmax.f32 %v317, 0.0
    %v320 = vld [vmem:[%s10] sm:$0xff]
    %v321 = vld [vmem:[%s10 + $0x8] sm:$0xff]
    %v322 = vld [vmem:[%s10 + $0x10] sm:$0xff]
    %v323 = vld [vmem:[%s10 + $0x18] sm:$0xff]
    %v324 = vperm.slane %v113, 5
    %v326 = vsel %vm176, %v319, 0
    %328 = vmatpush.msra.mxu0 0.0
    %329 = vmatpush.msra.mxu0 0.0
    %330 = vmatpush.msra.mxu0 0.0
    %331 = vmatpush.msra.mxu0 0.0
    %332 = vmatpush.msra.mxu0 0.0
    %333 = vmatpush.msra.mxu0 0.0
    %334 = vmatpush.msra.mxu0 0.0
    %335 = vmatpush.msra.mxu0 0.0
    %336 = vmatpush.msra.mxu0 0.0
    %337 = vmatpush.msra.mxu0 0.0
    %338 = vmatpush.msra.mxu0 0.0
    %339 = vmatpush.msra.mxu0 0.0
    %340 = vmatpush.msra.mxu0 %v323
    %341 = vmatpush.msra.mxu0 %v322
    %342 = vmatpush.msra.mxu0 %v321
    %343 = vmatpush.msra.mxu0 %v320
    %344 = vmatmul.f32.gmra.mxu0 %v326
    %v345 = vpop.f32.mrf.mxu0
    %v346 = vadd.f32 %v324, %v345
    %347 = vdwg.mxu0
    %v348 = vtanh.pop %v346
    %350 = vrot.lane.b32.xlu0 %v227, 4
    %v351 = vpop.permute.xlu0 %350
    %354 = vrot.lane.b32.xlu0 %v232, 4
    %v355 = vpop.permute.xlu0 %354
    %v357 = vsel %vm116, %v348, %v351
    %vm358 = vcmask 97280
    %v359 = vsel %vm358, %v357, %v355
    %vm360 = vcmask 162816
    %v361 = vsel %vm360, %v359, 0.0
    %362 = vst [vmem:[#allocation11] sm:$0xff] %v361
    // Predicated region
    $region70: #{tpu_custom_call.1} parent=1 // pred_check
      _
    $region71: #{tpu_custom_call.1} parent=1 // pred_check_branch
      %364 = sbr.rel (0) target = $region73
    $region72: #{tpu_custom_call.1} parent=1 // pred_region
      %366 = vsyncadd [#allocation4], 0
      %s368 = sshll.u32 [#allocation11], 4
      %s369 = int_to_ptr.vmem [resolvable:$true] %s368
      %s370 = sshll.u32 %s12, 4
      %s371 = int_to_ptr.hbm [resolvable:$true] %s370
      %373 = dma.vmem_to_hbm [thread:$0]  %s369, 128, %s371, [#allocation4]
    $region73: #{tpu_custom_call.1} parent=1 // pred_fallthru
      _
    // Predicated region
    $region74: #{tpu_custom_call.1} parent=1 // pred_check
      _
    $region75: #{tpu_custom_call.1} parent=1 // pred_check_branch
      %375 = sbr.rel (0) target = $region77
    $region76: #{tpu_custom_call.1} parent=1 // pred_region
      %377 = dma.done [#allocation4], 128
    $region77: #{tpu_custom_call.1} parent=1 // pred_fallthru
      _
    %378 = vsyncpa [#allocation3], 1
    %379 = vsyncpa [#allocation6], 1
    %380 = vsyncpa [#allocation9], 1
    %381 = vsyncpa [#allocation4], 1

</llo_original>
